<compile_context>
chip_gen: v6e
topology: v6e:2x2x1
jax: 0.10.0
libtpu: 0.0.40
codegen_flags: <defaults>
</compile_context>

<pallas_src>
import jax
import jax.numpy as jnp
from jax.experimental import pallas as pl
from jax.experimental.pallas import tpu as pltpu

GN_EPS = 1e-5  # matches torch.nn.GroupNorm default


def _shuffle_attn_kernel(x_ref, prm_ref, o_ref):
    # x_ref:   (1, 2, TQ, hw)  both halves of a TQ-row tile of one batch elem
    # prm_ref: (2*Q, 3)        per-row [a, bm, bias]; VMEM-resident
    # o_ref:   (1, TQ, 2*hw)   fused concat + channel_shuffle layout
    t = pl.program_id(1)
    tq = o_ref.shape[1]
    hw = x_ref.shape[3]
    q_total = prm_ref.shape[0] // 2
    inv_hw = 1.0 / hw
    # t*tq is a multiple of 8 by construction (tq % 8 == 0, or the row-tile
    # axis has a single step so t == 0).
    row0 = pl.multiple_of(t * tq, 8)

    halves = []
    for p in (0, 1):                                     # static unroll
        x = x_ref[0, p].astype(jnp.float32)              # (TQ, hw)
        prm = prm_ref[pl.ds(p * q_total + row0, tq), :]  # (TQ, 3)
        a = prm[:, 0:1]      # scale on normalized x   (spatial / GN branch)
        bm = prm[:, 1:2]     # scale on the spatial mean (channel branch)
        bias = prm[:, 2:3]   # additive bias

        mu = jnp.sum(x, axis=-1, keepdims=True) * inv_hw
        xc = x - mu
        var = jnp.sum(xc * xc, axis=-1, keepdims=True) * inv_hw   # two-pass
        alpha = a * jax.lax.rsqrt(var + GN_EPS)          # (TQ, 1)
        beta = bm * mu + bias                            # (TQ, 1)
        halves.append(x * jax.nn.sigmoid(alpha * xc + beta))

    # Lane concat: half p occupies lanes [p*hw, (p+1)*hw) -> final channel
    # 2*q + p after the free reshape in the wrapper (works for any hw).
    o_ref[0] = jnp.concatenate(halves, axis=-1).astype(o_ref.dtype)


def _choose_tiling(G, C2, hw, b, itemsize=4):
    """Pick T (groups per block) and an explicit VMEM limit, per chip."""
    try:
        vmem_cap = pltpu.get_tpu_info().vmem_capacity_bytes
    except Exception:
        vmem_cap = 64 << 20          # v7x-sized conservative fallback
    budget = int(vmem_cap * 0.7)     # headroom for scratch / regalloc

    # Double-buffered VMEM per grid step: input block (2*TQ*hw elems) +
    # output block (2*TQ*hw elems), x2 buffers.
    def working_set(t):
        return 8 * t * C2 * hw * itemsize

    valid = sorted({t for t in range(1, G + 1)
                    if G % t == 0 and ((t * C2) % 8 == 0 or t == G)})
    fitting = [t for t in valid if working_set(t) <= budget]
    if fitting:
        # Keep >= 2 grid steps so both v7x TensorCores get work and the DMA
        # pipeline has something to overlap with.
        multi = [t for t in fitting if b * (G // t) >= 2]
        T = max(multi) if multi else max(fitting)
    else:
        # TODO(synk): hw-chunked online-stats path for feature maps so large
        # that even a single-group block exceeds the VMEM budget.
        T = min(valid)

    vmem_limit = max(32 << 20,
                     min(int(vmem_cap * 0.9), working_set(T) + (16 << 20)))
    return T, vmem_limit


def shuffle_attention(x, params, G=8):
    """x: (b, c, h, w) NCHW. Returns (b, c, h, w), matching the torch module."""
    b, c, h, w = x.shape
    assert c % (2 * G) == 0, "channel must be divisible by 2*G"
    C2 = c // (2 * G)
    hw = h * w
    Q = G * C2                                   # rows per half per batch

    x = x.astype(jnp.float32)
    cweight, cbias, sweight, sbias, gn_w, gn_b = [
        p.reshape(C2).astype(jnp.float32) for p in params]

    # Unified per-branch coefficients: gate = sigmoid(a*xn + bm*mu + bias),
    # xn = (x - mu) * rsqrt(var + eps).  GroupNorm affine folded into the
    # spatial (sweight, sbias) affine.
    zeros = jnp.zeros((C2,), jnp.float32)
    a_s = jnp.stack([zeros, sweight * gn_w], 0)              # (2, C2)
    bm_s = jnp.stack([cweight, zeros], 0)                    # (2, C2)
    bias_s = jnp.stack([cbias, sweight * gn_b + sbias], 0)   # (2, C2)
    pv = jnp.stack([a_s, bm_s, bias_s], -1)                  # (2, C2, 3) by branch

    # Row (p, q) with q = r*C2 + j corresponds to branch (p*G + r) % 2 and
    # parameter channel j.  Flatten to (2*Q, 3) with row index p*Q + q.
    s_pr = (jnp.arange(2)[:, None] * G + jnp.arange(G)[None, :]) % 2   # (2, G)
    P = pv[s_pr].reshape(2 * Q, 3)

    T, vmem_limit = _choose_tiling(G, C2, hw, b)
    TQ = T * C2
    grid = (b, G // T)

    # Free contiguous view of NCHW: x4[bi, p, q, pix].
    x4 = x.reshape(b, 2, Q, hw)

    n_elem = b * c * h * w
    cost = pl.CostEstimate(
        flops=10 * n_elem,
        transcendentals=n_elem,
        bytes_accessed=2 * n_elem * 4 + int(P.size) * 4,
    )

    out = pl.pallas_call(
        _shuffle_attn_kernel,
        out_shape=jax.ShapeDtypeStruct((b, Q, 2 * hw), x.dtype),
        grid_spec=pltpu.PrefetchScalarGridSpec(
            num_scalar_prefetch=0,
            grid=grid,
            in_specs=[
                pl.BlockSpec((1, 2, TQ, hw), lambda bi, t: (bi, 0, t, 0)),
                # Small param table: full-array block with a constant index
                # map -> fetched once, stays resident in VMEM.
                pl.BlockSpec((2 * Q, 3), lambda bi, t: (0, 0)),
            ],
            out_specs=pl.BlockSpec((1, TQ, 2 * hw), lambda bi, t: (bi, t, 0)),
        ),
        compiler_params=pltpu.CompilerParams(
            dimension_semantics=("parallel", "parallel"),
            vmem_limit_bytes=vmem_limit),
        cost_estimate=cost,
    )(x4, P)

    # Element (bi, q, p*hw + i) == final channel 2*q + p  ->  free reshape.
    return out.reshape(b, c, h, w)


def shuffle_attention_ref(x, params, G=8):
    """Pure-JAX reference mirroring the PyTorch forward."""
    b, c, h, w = x.shape
    C2 = c // (2 * G)
    cweight, cbias, sweight, sbias, gn_w, gn_b = [p.reshape(C2, 1) for p in params]
    xg = x.reshape(b * G, c // G, h, w)
    x0, x1 = xg[:, :C2], xg[:, C2:]

    xc = jnp.mean(x0, axis=(2, 3), keepdims=True)
    xc = cweight[None, :, :, None] * xc + cbias[None, :, :, None]
    x_channel = x0 * jax.nn.sigmoid(xc)

    mu = jnp.mean(x1, axis=(2, 3), keepdims=True)
    var = jnp.mean((x1 - mu) ** 2, axis=(2, 3), keepdims=True)
    xn = (x1 - mu) / jnp.sqrt(var + GN_EPS)
    xn = gn_w[None, :, :, None] * xn + gn_b[None, :, :, None]
    xs = sweight[None, :, :, None] * xn + sbias[None, :, :, None]
    x_spatial = x1 * jax.nn.sigmoid(xs)

    out = jnp.concatenate([x_channel, x_spatial], axis=1).reshape(b, c, h, w)
    out = out.reshape(b, 2, c // 2, h, w).transpose(0, 2, 1, 3, 4).reshape(b, c, h, w)
    return out


if __name__ == "__main__":
    def make_params(key, C2):
        k1, k2, k3, k4, k5, k6 = jax.random.split(key, 6)
        return (0.5 * jax.random.normal(k1, (C2, 1), jnp.float32),
                0.5 * jax.random.normal(k2, (C2, 1), jnp.float32),
                0.5 * jax.random.normal(k3, (C2, 1), jnp.float32),
                0.5 * jax.random.normal(k4, (C2, 1), jnp.float32),
                1.0 + 0.5 * jax.random.normal(k5, (C2, 1), jnp.float32),
                0.5 * jax.random.normal(k6, (C2, 1), jnp.float32))

    G = 8
    key = jax.random.PRNGKey(0)
    kx1, kp1, kx2, kp2 = jax.random.split(key, 4)

    # Case 1: lane-aligned spatial size (h*w % 128 == 0).
    b, c, h, w = 2, 32, 16, 16
    C2 = c // (2 * G)
    x = jax.random.normal(kx1, (b, c, h, w), dtype=jnp.float32)
    params = make_params(kp1, C2)
    out = jax.block_until_ready(shuffle_attention(x, params, G=G))
    ref = shuffle_attention_ref(x, params, G=G)
    assert out.shape == (b, c, h, w)
    assert jnp.allclose(out, ref, atol=2e-5, rtol=2e-5), "mismatch (16x16)"

    # Case 2: typical non-aligned FPN spatial size (h*w = 196, not % 128) —
    # exercises the any-hw fused-shuffle path (no fallback, no extra HBM pass).
    b2, c2, h2, w2 = 2, 32, 14, 14
    x2 = jax.random.normal(kx2, (b2, c2, h2, w2), dtype=jnp.float32)
    params2 = make_params(kp2, C2)
    out2 = jax.block_until_ready(shuffle_attention(x2, params2, G=G))
    ref2 = shuffle_attention_ref(x2, params2, G=G)
    assert jnp.allclose(out2, ref2, atol=2e-5, rtol=2e-5), "mismatch (14x14)"

    # Case 3: the module's default parameter init (zeros / ones).
    det = (jnp.zeros((C2, 1)), jnp.ones((C2, 1)), jnp.zeros((C2, 1)),
           jnp.ones((C2, 1)), jnp.ones((C2, 1)), jnp.zeros((C2, 1)))
    out3 = jax.block_until_ready(shuffle_attention(x, det, G=G))
    ref3 = shuffle_attention_ref(x, det, G=G)
    assert jnp.allclose(out3, ref3, atol=2e-5, rtol=2e-5), "mismatch (default init)"

    print("KERNEL_OK")
</pallas_src>

<mosaic_0001>
module attributes {stable_mosaic.version = 11 : i64} {
  func.func @_shuffle_attn_kernel(%arg0: i32, %arg1: i32, %arg2: memref<1x2x16x256xf32, #tpu.memory_space<vmem>>, %arg3: memref<32x3xf32, #tpu.memory_space<vmem>>, %arg4: memref<1x16x512xf32, #tpu.memory_space<vmem>>) attributes {dimension_semantics = [#tpu.dimension_semantics<parallel>, #tpu.dimension_semantics<parallel>], iteration_bounds = array<i64: 2, 1>, scalar_prefetch = 0 : i64, scratch_operands = 0 : i64, tpu.core_type = #tpu.core_type<tc>, window_params = [{transform_indices = @transform_0, window_bounds = array<i64: 1, 2, 16, 256>}, {pipeline_mode = #tpu.pipeline_mode<synchronous>, transform_indices = @transform_1, window_bounds = array<i64: 32, 3>}, {transform_indices = @transform_2, window_bounds = array<i64: 1, 16, 512>}]} {
    %c16_i32 = arith.constant 16 : i32
    %0 = arith.muli %arg1, %c16_i32 : i32
    %1 = tpu.assume_multiple %0, 8 : i32
    %c0 = arith.constant 0 : index
    %c0_0 = arith.constant 0 : index
    %c0_1 = arith.constant 0 : index
    %c0_2 = arith.constant 0 : index
    %2 = vector.load %arg2[%c0, %c0_0, %c0_1, %c0_2] : memref<1x2x16x256xf32, #tpu.memory_space<vmem>>, vector<1x1x16x256xf32>
    %3 = vector.shape_cast %2 : vector<1x1x16x256xf32> to vector<16x256xf32>
    %c0_i32 = arith.constant 0 : i32
    %4 = arith.addi %c0_i32, %1 : i32
    %5 = arith.index_cast %4 : i32 to index
    %c0_3 = arith.constant 0 : index
    %6 = vector.load %arg3[%5, %c0_3] : memref<32x3xf32, #tpu.memory_space<vmem>>, vector<16x3xf32>
    %7 = vector.extract_strided_slice %6 {offsets = [0, 0], sizes = [16, 1], strides = [1, 1]} : vector<16x3xf32> to vector<16x1xf32>
    %8 = vector.extract_strided_slice %6 {offsets = [0, 1], sizes = [16, 1], strides = [1, 1]} : vector<16x3xf32> to vector<16x1xf32>
    %9 = vector.extract_strided_slice %6 {offsets = [0, 2], sizes = [16, 1], strides = [1, 1]} : vector<16x3xf32> to vector<16x1xf32>
    %cst = arith.constant dense<0.000000e+00> : vector<16xf32>
    %10 = vector.multi_reduction <add>, %3, %cst [1] : vector<16x256xf32> to vector<16xf32>
    %11 = vector.shape_cast %10 : vector<16xf32> to vector<16x1xf32>
    %cst_4 = arith.constant 3.906250e-03 : f32
    %12 = vector.broadcast %cst_4 : f32 to vector<16x1xf32>
    %13 = arith.mulf %11, %12 : vector<16x1xf32>
    %14 = vector.broadcast %13 : vector<16x1xf32> to vector<16x256xf32>
    %15 = arith.subf %3, %14 : vector<16x256xf32>
    %16 = arith.mulf %15, %15 : vector<16x256xf32>
    %cst_5 = arith.constant dense<0.000000e+00> : vector<16xf32>
    %17 = vector.multi_reduction <add>, %16, %cst_5 [1] : vector<16x256xf32> to vector<16xf32>
    %18 = vector.shape_cast %17 : vector<16xf32> to vector<16x1xf32>
    %cst_6 = arith.constant 3.906250e-03 : f32
    %19 = vector.broadcast %cst_6 : f32 to vector<16x1xf32>
    %20 = arith.mulf %18, %19 : vector<16x1xf32>
    %cst_7 = arith.constant 9.99999974E-6 : f32
    %21 = vector.broadcast %cst_7 : f32 to vector<16x1xf32>
    %22 = arith.addf %20, %21 : vector<16x1xf32>
    %23 = math.rsqrt %22 : vector<16x1xf32>
    %24 = arith.mulf %7, %23 : vector<16x1xf32>
    %25 = arith.mulf %8, %13 : vector<16x1xf32>
    %26 = arith.addf %25, %9 : vector<16x1xf32>
    %27 = vector.broadcast %24 : vector<16x1xf32> to vector<16x256xf32>
    %28 = arith.mulf %27, %15 : vector<16x256xf32>
    %29 = vector.broadcast %26 : vector<16x1xf32> to vector<16x256xf32>
    %30 = arith.addf %28, %29 : vector<16x256xf32>
    %31 = arith.negf %30 : vector<16x256xf32>
    %32 = math.exp %31 : vector<16x256xf32>
    %cst_8 = arith.constant 1.000000e+00 : f32
    %33 = vector.broadcast %cst_8 : f32 to vector<16x256xf32>
    %34 = arith.addf %33, %32 : vector<16x256xf32>
    %35 = arith.divf %33, %34 : vector<16x256xf32>
    %36 = arith.mulf %3, %35 : vector<16x256xf32>
    %c0_9 = arith.constant 0 : index
    %c1 = arith.constant 1 : index
    %c0_10 = arith.constant 0 : index
    %c0_11 = arith.constant 0 : index
    %37 = vector.load %arg2[%c0_9, %c1, %c0_10, %c0_11] : memref<1x2x16x256xf32, #tpu.memory_space<vmem>>, vector<1x1x16x256xf32>
    %38 = vector.shape_cast %37 : vector<1x1x16x256xf32> to vector<16x256xf32>
    %c16_i32_12 = arith.constant 16 : i32
    %39 = arith.addi %c16_i32_12, %1 : i32
    %40 = arith.index_cast %39 : i32 to index
    %c0_13 = arith.constant 0 : index
    %41 = vector.load %arg3[%40, %c0_13] : memref<32x3xf32, #tpu.memory_space<vmem>>, vector<16x3xf32>
    %42 = vector.extract_strided_slice %41 {offsets = [0, 0], sizes = [16, 1], strides = [1, 1]} : vector<16x3xf32> to vector<16x1xf32>
    %43 = vector.extract_strided_slice %41 {offsets = [0, 1], sizes = [16, 1], strides = [1, 1]} : vector<16x3xf32> to vector<16x1xf32>
    %44 = vector.extract_strided_slice %41 {offsets = [0, 2], sizes = [16, 1], strides = [1, 1]} : vector<16x3xf32> to vector<16x1xf32>
    %cst_14 = arith.constant dense<0.000000e+00> : vector<16xf32>
    %45 = vector.multi_reduction <add>, %38, %cst_14 [1] : vector<16x256xf32> to vector<16xf32>
    %46 = vector.shape_cast %45 : vector<16xf32> to vector<16x1xf32>
    %cst_15 = arith.constant 3.906250e-03 : f32
    %47 = vector.broadcast %cst_15 : f32 to vector<16x1xf32>
    %48 = arith.mulf %46, %47 : vector<16x1xf32>
    %49 = vector.broadcast %48 : vector<16x1xf32> to vector<16x256xf32>
    %50 = arith.subf %38, %49 : vector<16x256xf32>
    %51 = arith.mulf %50, %50 : vector<16x256xf32>
    %cst_16 = arith.constant dense<0.000000e+00> : vector<16xf32>
    %52 = vector.multi_reduction <add>, %51, %cst_16 [1] : vector<16x256xf32> to vector<16xf32>
    %53 = vector.shape_cast %52 : vector<16xf32> to vector<16x1xf32>
    %cst_17 = arith.constant 3.906250e-03 : f32
    %54 = vector.broadcast %cst_17 : f32 to vector<16x1xf32>
    %55 = arith.mulf %53, %54 : vector<16x1xf32>
    %cst_18 = arith.constant 9.99999974E-6 : f32
    %56 = vector.broadcast %cst_18 : f32 to vector<16x1xf32>
    %57 = arith.addf %55, %56 : vector<16x1xf32>
    %58 = math.rsqrt %57 : vector<16x1xf32>
    %59 = arith.mulf %42, %58 : vector<16x1xf32>
    %60 = arith.mulf %43, %48 : vector<16x1xf32>
    %61 = arith.addf %60, %44 : vector<16x1xf32>
    %62 = vector.broadcast %59 : vector<16x1xf32> to vector<16x256xf32>
    %63 = arith.mulf %62, %50 : vector<16x256xf32>
    %64 = vector.broadcast %61 : vector<16x1xf32> to vector<16x256xf32>
    %65 = arith.addf %63, %64 : vector<16x256xf32>
    %66 = arith.negf %65 : vector<16x256xf32>
    %67 = math.exp %66 : vector<16x256xf32>
    %cst_19 = arith.constant 1.000000e+00 : f32
    %68 = vector.broadcast %cst_19 : f32 to vector<16x256xf32>
    %69 = arith.addf %68, %67 : vector<16x256xf32>
    %70 = arith.divf %68, %69 : vector<16x256xf32>
    %71 = arith.mulf %38, %70 : vector<16x256xf32>
    %72 = tpu.concatenate %36, %71 in 1 : vector<16x256xf32>, vector<16x256xf32> -> vector<16x512xf32>
    %c0_20 = arith.constant 0 : index
    %c0_21 = arith.constant 0 : index
    %c0_22 = arith.constant 0 : index
    %73 = vector.load %arg4[%c0_20, %c0_21, %c0_22] : memref<1x16x512xf32, #tpu.memory_space<vmem>>, vector<1x16x512xf32>
    %74 = vector.shape_cast %73 : vector<1x16x512xf32> to vector<16x512xf32>
    %75 = vector.shape_cast %72 : vector<16x512xf32> to vector<1x16x512xf32>
    tpu.vector_store %arg4[%c0_20, %c0_21, %c0_22], %75 {strides = array<i32>} : memref<1x16x512xf32, #tpu.memory_space<vmem>>, vector<1x16x512xf32>,
    return
  }
  func.func @transform_0(%arg0: i32, %arg1: i32) -> (i32, i32, i32, i32) {
    %c0_i32 = arith.constant 0 : i32
    %c0_i32_0 = arith.constant 0 : i32
    %c0_i32_1 = arith.constant 0 : i32
    return %arg0, %c0_i32, %arg1, %c0_i32_0 : i32, i32, i32, i32
  }
  func.func @transform_1(%arg0: i32, %arg1: i32) -> (i32, i32) {
    %c0_i32 = arith.constant 0 : i32
    %c0_i32_0 = arith.constant 0 : i32
    %c0_i32_1 = arith.constant 0 : i32
    return %c0_i32, %c0_i32_0 : i32, i32
  }
  func.func @transform_2(%arg0: i32, %arg1: i32) -> (i32, i32, i32) {
    %c0_i32 = arith.constant 0 : i32
    %c0_i32_0 = arith.constant 0 : i32
    return %arg0, %arg1, %c0_i32 : i32, i32, i32
  }
}

</mosaic_0001>

<llo_original>
// kernel: tpu_custom_call.1
$region0: #{tpu_custom_call.1}
  #allocation0 [shape = 'u32[]', space=smem, size = 0x4, offset = 0x4, fixed_abs, tag = 'smem constant byte address 0x4 - core index']
  #allocation1 [shape = 'u32[144,128]{1,0:T(1,128)}', space=vmem, size = 0x12000, scoped, tag = 'internal scratch']
  %s0 = inlined_call_operand.hbm [shape: f32[2,2,16,256], index: 0, kind: input, shape index: {}]
  %s1 = inlined_call_operand.vmem [shape: f32[32,3], index: 1, kind: input, shape index: {}]
  %s2 = inlined_call_operand.hbm [shape: f32[2,16,512], index: 2, kind: output, shape index: {}]
  %s3 = sld [smem:[#allocation0]]
  $region45: #{tpu_custom_call.1} parent=0
    _
  %s5 = ssub.s32 1, %s3
  %s6 = scalar_select 0, %s5, %s3
  $region1: #{tpu_custom_call.1} parent=0
    #allocation2 [shape = 'u8[65536]{0}', space=vmem, size = 0x10000, scoped, tag = 'input window, operand 0']
    #allocation3 [shape = 's32[2]{0}', space=sflag, size = 0x8, scoped, tag = 'scoped memory for tpu_custom_call.1']
    #allocation4 [shape = 's32[2]{0}', space=sflag, size = 0x8, scoped, tag = 'scoped memory for tpu_custom_call.1']
    #allocation5 [shape = 'u8[65536]{0}', space=vmem, size = 0x10000, scoped, tag = 'output window, operand 0']
    %7 = vsyncpa [#allocation3], 0
    %s8 = scalar_lea.sflag [#allocation3], 1
    %9 = vsyncpa %s8, 0
    %10 = vsyncpa [#allocation4], 0
    %s11 = scalar_lea.sflag [#allocation4], 1
    %12 = vsyncpa %s11, 0
    loop: start=0, step=1, limit=4
    $region2: #{tpu_custom_call.1} parent=1 // loop_pre_header
      _
    $region3: #{tpu_custom_call.1} parent=1 // loop_header
      %s14 = sphi 0, %s18
      %p15 = scmp.ge.s32.totalorder %s14, 4
      %s21 = sphi 0, %s33
      %s22 = sphi 0, %s29
      %s23 = sphi 0, %s21
      %s24 = sphi 0, %s22
      %s25 = sphi 0, %s23
      %s26 = sphi 0, %s24
      %s38 = sphi 0, %s40
      %s41 = sphi 0, %s38
      %s42 = sphi 0, %s41
      %s58 = sphi 0, %s42
      %s62 = sphi 0, %s62
      %s64 = sphi 0, %s62
      %s65 = sphi 0, %s64
      %s79 = sphi 0, %s65
      %s87 = sphi 0, %s89
      %s90 = sphi 0, %s87
      %s91 = sphi 0, %s90
      %s107 = sphi 0, %s91
    $region4: #{tpu_custom_call.1} parent=1 // loop_header_branch
      %17 = sbr.rel (%p15) target = $region8
    $region5: #{tpu_custom_call.1} parent=1 // loop_body
      %s19 = ssub.s32 %s14, 1
      %s20 = ssub.s32 %s14, 2
      %s27 = sadd.s32 1, %s22
      %p28 = scmp.ge.s32.totalorder %s27, 1
      %s29 = scalar_select %p28, 0, %s27
      %s30 = sadd.s32 1, %s21
      %s31 = scalar_select %p28, %s30, %s21
      %p32 = scmp.ge.s32.totalorder %s31, 2
      %s33 = scalar_select %p32, 0, %s31
      %s34 = ssub.s32 %s21, %s33
      %s35 = ssub.s32 %s22, %s29
      %s36 = sor.u32 %s34, %s35
      %p37 = scmp.eq.s32.totalorder %s36, 0
      %s39 = sadd.s32 %s38, 1
      %s40 = scalar_select %p37, %s38, %s39
      %p43 = pneg %p37
      %p44 = scmp.eq.s32.totalorder %s14, 1
      %p45 = por %p43, %p44
      %p46 = scmp.ne.s32.totalorder %s38, %s41
      %p47 = scmp.eq.s32.totalorder %s14, 0
      %p48 = por %p46, %p47
      %p49 = scmp.ne.s32.totalorder %s38, %s41
      %p50 = scmp.eq.s32.totalorder %s19, 1
      %p51 = por %p49, %p50
      %p52 = scmp.ne.s32.totalorder %s41, %s42
      %p53 = scmp.eq.s32.totalorder %s19, 0
      %p54 = por %p52, %p53
      %p55 = scmp.ne.s32.totalorder %s41, %s42
      %p56 = scmp.eq.s32.totalorder %s20, 1
      %p57 = por %p55, %p56
      %p59 = scmp.ne.s32.totalorder %s42, %s58
      %p60 = scmp.eq.s32.totalorder %s20, 0
      %p61 = por %p59, %p60
      %s63 = sadd.s32 %s62, 1
      %p66 = scmp.eq.s32.totalorder %s14, 1
      %p67 = scmp.ne.s32.totalorder %s62, %s64
      %p68 = scmp.eq.s32.totalorder %s14, 0
      %p69 = por %p67, %p68
      %p70 = scmp.ne.s32.totalorder %s62, %s64
      %p71 = scmp.eq.s32.totalorder %s19, 1
      %p72 = por %p70, %p71
      %p73 = scmp.ne.s32.totalorder %s64, %s65
      %p74 = scmp.eq.s32.totalorder %s19, 0
      %p75 = por %p73, %p74
      %p76 = scmp.ne.s32.totalorder %s64, %s65
      %p77 = scmp.eq.s32.totalorder %s20, 1
      %p78 = por %p76, %p77
      %p80 = scmp.ne.s32.totalorder %s65, %s79
      %p81 = scmp.eq.s32.totalorder %s20, 0
      %p82 = por %p80, %p81
      %s83 = ssub.s32 %s21, %s33
      %s84 = ssub.s32 %s22, %s29
      %s85 = sor.u32 %s83, %s84
      %p86 = scmp.eq.s32.totalorder %s85, 0
      %s88 = sadd.s32 %s87, 1
      %s89 = scalar_select %p86, %s87, %s88
      %p92 = pneg %p86
      %p93 = scmp.eq.s32.totalorder %s14, 1
      %p94 = por %p92, %p93
      %p95 = scmp.ne.s32.totalorder %s87, %s90
      %p96 = scmp.eq.s32.totalorder %s14, 0
      %p97 = por %p95, %p96
      %p98 = scmp.ne.s32.totalorder %s87, %s90
      %p99 = scmp.eq.s32.totalorder %s19, 1
      %p100 = por %p98, %p99
      %p101 = scmp.ne.s32.totalorder %s90, %s91
      %p102 = scmp.eq.s32.totalorder %s19, 0
      %p103 = por %p101, %p102
      %p104 = scmp.ne.s32.totalorder %s90, %s91
      %p105 = scmp.eq.s32.totalorder %s20, 1
      %p106 = por %p104, %p105
      %p108 = scmp.ne.s32.totalorder %s91, %s107
      %p109 = scmp.eq.s32.totalorder %s20, 0
      %p110 = por %p108, %p109
      %p111 = scmp.le.s32.totalorder 1, %s14
      %p112 = scmp.lt.s32.totalorder %s14, 3
      %p113 = pnand %p111, %p112
      %p114 = pneg %p113
      // Predicated region
      $region9: #{tpu_custom_call.1} parent=5 // pred_check
        _
      $region10: #{tpu_custom_call.1} parent=5 // pred_check_branch
        %116 = sbr.rel (%p113) target = $region12
      $region11: #{tpu_custom_call.1} parent=5 // pred_region
        %s117 = ssub.s32 %s14, 1
        // Predicated region
        $region13: #{tpu_custom_call.1} parent=11 // pred_check
          %p118 = pneg %p75
        $region14: #{tpu_custom_call.1} parent=11 // pred_check_branch
          %120 = sbr.rel (%p118) target = $region16
        $region15: #{tpu_custom_call.1} parent=11 // pred_region
          _
        $region16: #{tpu_custom_call.1} parent=11 // pred_fallthru
          _
      $region12: #{tpu_custom_call.1} parent=5 // pred_fallthru
        _
      %p121 = scmp.lt.s32.totalorder %s14, 2
      // Predicated region
      $region17: #{tpu_custom_call.1} parent=5 // pred_check
        %p122 = pneg %p121
      $region18: #{tpu_custom_call.1} parent=5 // pred_check_branch
        %124 = sbr.rel (%p122) target = $region20
      $region19: #{tpu_custom_call.1} parent=5 // pred_region
        // Predicated region
        $region21: #{tpu_custom_call.1} parent=19 // pred_check
          %p125 = pneg %p48
        $region22: #{tpu_custom_call.1} parent=19 // pred_check_branch
          %127 = sbr.rel (%p125) target = $region24
        $region23: #{tpu_custom_call.1} parent=19 // pred_region
          %s128 = sand.u32 %s38, 1
          %s129 = scalar_lea.sflag [#allocation3], %s128
          %s130 = sand.u32 %s38, 1
          %s131 = smul.addr %s130, 64
          %s132 = scalar_lea.vmem [#allocation2], %s131
          %s133 = smul.u32 2, %s22
          %s135 = ssub.s32 1024, 1024
          %136 = vsyncadd %s129, %s135
          %s137 = smul.addr %s133, 2
          %s138 = smul.addr %s21, 8
          %s139 = sadd.s32 %s137, %s138
          %s140 = smul.addr %s139, 128
          %s141 = scalar_lea.hbm %s0, %s140
          %s142 = sshll.u32 %s132, 4
          %s143 = int_to_ptr.vmem [resolvable:$true] %s142
          %148 = dma.hbm_to_vmem [thread:$0]  %s141, 1024, %s143, %s129, 256, 256, 16
        $region24: #{tpu_custom_call.1} parent=19 // pred_fallthru
          _
      $region20: #{tpu_custom_call.1} parent=5 // pred_fallthru
        _
      %p149 = scmp.le.s32.totalorder 1, %s14
      %p150 = scmp.lt.s32.totalorder %s14, 3
      %p151 = pnand %p149, %p150
      %p152 = pneg %p151
      // Predicated region
      $region25: #{tpu_custom_call.1} parent=5 // pred_check
        _
      $region26: #{tpu_custom_call.1} parent=5 // pred_check_branch
        %154 = sbr.rel (%p151) target = $region28
      $region27: #{tpu_custom_call.1} parent=5 // pred_region
        %s155 = ssub.s32 %s14, 1
        %s156 = sand.u32 %s41, 1
        %s157 = scalar_lea.sflag [#allocation3], %s156
        %s158 = sand.u32 %s41, 1
        %s159 = smul.addr %s158, 64
        %s160 = scalar_lea.vmem [#allocation2], %s159
        // Predicated region
        $region29: #{tpu_custom_call.1} parent=27 // pred_check
          %p161 = pneg %p54
        $region30: #{tpu_custom_call.1} parent=27 // pred_check_branch
          %163 = sbr.rel (%p161) target = $region32
        $region31: #{tpu_custom_call.1} parent=27 // pred_region
          %164 = dma.done %s157, 1024
        $region32: #{tpu_custom_call.1} parent=27 // pred_fallthru
          _
        %s165 = sand.u32 %s41, 1
        %s166 = scalar_lea.sflag [#allocation3], %s165
        %s167 = sand.u32 %s41, 1
        %s168 = smul.addr %s167, 64
        %s169 = scalar_lea.vmem [#allocation2], %s168
        %p170 = pneg %p54
        %p171 = pneg %p51
        %p172 = pneg %p75
        %p173 = pneg %p72
        %p174 = pneg %p103
        %p175 = pneg %p100
        %s176 = sand.u32 %s90, 1
        %s177 = scalar_lea.sflag [#allocation4], %s176
        %s178 = sand.u32 %s90, 1
        %s179 = smul.addr %s178, 64
        %s180 = scalar_lea.vmem [#allocation5], %s179
        %s181 = smul.u32 2, %s24
        %s182 = smul.u32 2, %s24
        %s183 = smul.u32 %s24, 16
        %v184 = vld [vmem:[%s160] sm:$0xff]
        %v185 = vld [vmem:[%s160 + $0x8] sm:$0xff]
        %v186 = vld [vmem:[%s160 + $0x10] sm:$0xff]
        %v187 = vld [vmem:[%s160 + $0x18] sm:$0xff]
        %s188 = scalar_lea.vmem %s1, %s183
        %v189 = vld [vmem:[%s188] sm:$0xff]
        %v190 = vld [vmem:[%s188 + $0x8] sm:$0xff]
        %v191 = vadd.f32 %v184, %v185
        %192 = vadd.xlane.f32.xlu0 %v191
        %v193 = vpop.xlane.xlu0 %192
        %v194 = vadd.f32 %v186, %v187
        %195 = vadd.xlane.f32.xlu0 %v194
        %v196 = vpop.xlane.xlu0 %195
        %v197 = vmul.f32 %v193, 0.00390625
        %v198 = vmul.f32 %v196, 0.00390625
        %v199 = vsub.f32 %v184, %v197
        %v200 = vsub.f32 %v185, %v197
        %v201 = vsub.f32 %v186, %v198
        %v202 = vsub.f32 %v187, %v198
        %v203 = vmul.f32 %v199, %v199
        %v204 = vmul.f32 %v200, %v200
        %v205 = vmul.f32 %v201, %v201
        %v206 = vmul.f32 %v202, %v202
        %v207 = vadd.f32 %v203, %v204
        %208 = vadd.xlane.f32.xlu0 %v207
        %v209 = vpop.xlane.xlu0 %208
        %v210 = vadd.f32 %v205, %v206
        %211 = vadd.xlane.f32.xlu0 %v210
        %v212 = vpop.xlane.xlu0 %211
        %v213 = vmul.f32 %v209, 0.00390625
        %v214 = vmul.f32 %v212, 0.00390625
        %v215 = vadd.f32 %v213, 1e-05
        %v216 = vadd.f32 %v214, 1e-05
        %v217 = vrsqrt.pop %v215
        %v218 = vrsqrt.pop %v216
        %v219 = vmul.f32 %v189, %v217
        %v220 = vmul.f32 %v190, %v218
        %v221 = vmul.f32 %v189, %v197
        %v222 = vmul.f32 %v190, %v198
        %225 = vrot.lane.b32.xlu0 %v189, 127
        %v226 = vpop.permute.xlu0 %225
        %227 = vrot.lane.b32.xlu0 %v190, 127
        %v228 = vpop.permute.xlu0 %227
        %v231 = vadd.f32 %v221, %v226
        %v232 = vadd.f32 %v222, %v228
        %234 = vset.pattern.permute.xlu0 0
        %235 = vperm.xlu0 %234, %v219
        %v236 = vpop.permute.xlu0 %235
        %239 = vset.pattern.permute.xlu0 0
        %240 = vperm.xlu0 %239, %v220
        %v241 = vpop.permute.xlu0 %240
        %v243 = vmul.f32 %v236, %v199
        %v244 = vmul.f32 %v236, %v200
        %v245 = vmul.f32 %v241, %v201
        %v246 = vmul.f32 %v241, %v202
        %248 = vset.pattern.permute.xlu0 1
        %249 = vperm.xlu0 %248, %v231
        %v250 = vpop.permute.xlu0 %249
        %253 = vset.pattern.permute.xlu0 1
        %254 = vperm.xlu0 %253, %v232
        %v255 = vpop.permute.xlu0 %254
        %v257 = vadd.f32 %v243, %v250
        %v258 = vadd.f32 %v244, %v250
        %v259 = vadd.f32 %v245, %v255
        %v260 = vadd.f32 %v246, %v255
        %v261 = vxor.u32 %v257, 2147483648
        %v262 = vxor.u32 %v258, 2147483648
        %v263 = vxor.u32 %v259, 2147483648
        %v264 = vxor.u32 %v260, 2147483648
        %v265 = vmul.f32 %v261, 1.442695
        %v266 = vpow.pop %v265
        %v267 = vmul.f32 %v262, 1.442695
        %v268 = vpow.pop %v267
        %v269 = vmul.f32 %v263, 1.442695
        %v270 = vpow.pop %v269
        %v271 = vmul.f32 %v264, 1.442695
        %v272 = vpow.pop %v271
        %v273 = vadd.f32 %v266, 1.0
        %v274 = vadd.f32 %v268, 1.0
        %v275 = vadd.f32 %v270, 1.0
        %v276 = vadd.f32 %v272, 1.0
        %v277 = vrcp.pop %v273
        %v278 = vmul.f32 1.0, %v277
        %v279 = vrcp.pop %v274
        %v280 = vmul.f32 1.0, %v279
        %v281 = vrcp.pop %v275
        %v282 = vmul.f32 1.0, %v281
        %v283 = vrcp.pop %v276
        %v284 = vmul.f32 1.0, %v283
        %v285 = vmul.f32 %v184, %v278
        %v286 = vmul.f32 %v185, %v280
        %v287 = vmul.f32 %v186, %v282
        %v288 = vmul.f32 %v187, %v284
        %s289 = scalar_lea.vmem %s160, 32 [#allocation2]
        %v290 = vld [vmem:[%s289] sm:$0xff]
        %v291 = vld [vmem:[%s289 + $0x8] sm:$0xff]
        %v292 = vld [vmem:[%s289 + $0x10] sm:$0xff]
        %v293 = vld [vmem:[%s289 + $0x18] sm:$0xff]
        %s294 = sadd.s32 %s183, 16
        %s295 = scalar_lea.vmem %s1, %s294
        %v296 = vld [vmem:[%s295] sm:$0xff]
        %v297 = vld [vmem:[%s295 + $0x8] sm:$0xff]
        %v298 = vadd.f32 %v290, %v291
        %299 = vadd.xlane.f32.xlu0 %v298
        %v300 = vpop.xlane.xlu0 %299
        %v301 = vadd.f32 %v292, %v293
        %302 = vadd.xlane.f32.xlu0 %v301
        %v303 = vpop.xlane.xlu0 %302
        %v304 = vmul.f32 %v300, 0.00390625
        %v305 = vmul.f32 %v303, 0.00390625
        %v306 = vsub.f32 %v290, %v304
        %v307 = vsub.f32 %v291, %v304
        %v308 = vsub.f32 %v292, %v305
        %v309 = vsub.f32 %v293, %v305
        %v310 = vmul.f32 %v306, %v306
        %v311 = vmul.f32 %v307, %v307
        %v312 = vmul.f32 %v308, %v308
        %v313 = vmul.f32 %v309, %v309
        %v314 = vadd.f32 %v310, %v311
        %315 = vadd.xlane.f32.xlu0 %v314
        %v316 = vpop.xlane.xlu0 %315
        %v317 = vadd.f32 %v312, %v313
        %318 = vadd.xlane.f32.xlu0 %v317
        %v319 = vpop.xlane.xlu0 %318
        %v320 = vmul.f32 %v316, 0.00390625
        %v321 = vmul.f32 %v319, 0.00390625
        %v322 = vadd.f32 %v320, 1e-05
        %v323 = vadd.f32 %v321, 1e-05
        %v324 = vrsqrt.pop %v322
        %v325 = vrsqrt.pop %v323
        %v326 = vmul.f32 %v296, %v324
        %v327 = vmul.f32 %v297, %v325
        %v328 = vmul.f32 %v296, %v304
        %v329 = vmul.f32 %v297, %v305
        %332 = vrot.lane.b32.xlu0 %v296, 127
        %v333 = vpop.permute.xlu0 %332
        %334 = vrot.lane.b32.xlu0 %v297, 127
        %v335 = vpop.permute.xlu0 %334
        %v338 = vadd.f32 %v328, %v333
        %v339 = vadd.f32 %v329, %v335
        %341 = vset.pattern.permute.xlu0 0
        %342 = vperm.xlu0 %341, %v326
        %v343 = vpop.permute.xlu0 %342
        %346 = vset.pattern.permute.xlu0 0
        %347 = vperm.xlu0 %346, %v327
        %v348 = vpop.permute.xlu0 %347
        %v350 = vmul.f32 %v343, %v306
        %v351 = vmul.f32 %v343, %v307
        %v352 = vmul.f32 %v348, %v308
        %v353 = vmul.f32 %v348, %v309
        %355 = vset.pattern.permute.xlu0 1
        %356 = vperm.xlu0 %355, %v338
        %v357 = vpop.permute.xlu0 %356
        %360 = vset.pattern.permute.xlu0 1
        %361 = vperm.xlu0 %360, %v339
        %v362 = vpop.permute.xlu0 %361
        %v364 = vadd.f32 %v350, %v357
        %v365 = vadd.f32 %v351, %v357
        %v366 = vadd.f32 %v352, %v362
        %v367 = vadd.f32 %v353, %v362
        %v368 = vxor.u32 %v364, 2147483648
        %v369 = vxor.u32 %v365, 2147483648
        %v370 = vxor.u32 %v366, 2147483648
        %v371 = vxor.u32 %v367, 2147483648
        %v372 = vmul.f32 %v368, 1.442695
        %v373 = vpow.pop %v372
        %v374 = vmul.f32 %v369, 1.442695
        %v375 = vpow.pop %v374
        %v376 = vmul.f32 %v370, 1.442695
        %v377 = vpow.pop %v376
        %v378 = vmul.f32 %v371, 1.442695
        %v379 = vpow.pop %v378
        %v380 = vadd.f32 %v373, 1.0
        %v381 = vadd.f32 %v375, 1.0
        %v382 = vadd.f32 %v377, 1.0
        %v383 = vadd.f32 %v379, 1.0
        %v384 = vrcp.pop %v380
        %v385 = vmul.f32 1.0, %v384
        %v386 = vrcp.pop %v381
        %v387 = vmul.f32 1.0, %v386
        %v388 = vrcp.pop %v382
        %v389 = vmul.f32 1.0, %v388
        %v390 = vrcp.pop %v383
        %v391 = vmul.f32 1.0, %v390
        %v392 = vmul.f32 %v290, %v385
        %v393 = vmul.f32 %v291, %v387
        %v394 = vmul.f32 %v292, %v389
        %v395 = vmul.f32 %v293, %v391
        %396 = vst [vmem:[%s180] sm:$0xff] %v285
        %397 = vst [vmem:[%s180 + $0x8] sm:$0xff] %v286
        %398 = vst [vmem:[%s180 + $0x10] sm:$0xff] %v392
        %399 = vst [vmem:[%s180 + $0x18] sm:$0xff] %v393
        %400 = vst [vmem:[%s180 + $0x20] sm:$0xff] %v287
        %401 = vst [vmem:[%s180 + $0x28] sm:$0xff] %v288
        %402 = vst [vmem:[%s180 + $0x30] sm:$0xff] %v394
        %403 = vst [vmem:[%s180 + $0x38] sm:$0xff] %v395
        %s404 = sand.u32 %s90, 1
        %s405 = scalar_lea.sflag [#allocation4], %s404
        %s406 = sand.u32 %s90, 1
        %s407 = smul.addr %s406, 64
        %s408 = scalar_lea.vmem [#allocation5], %s407
        // Predicated region
        $region33: #{tpu_custom_call.1} parent=27 // pred_check
          %p409 = pneg %p100
        $region34: #{tpu_custom_call.1} parent=27 // pred_check_branch
          %411 = sbr.rel (%p409) target = $region36
        $region35: #{tpu_custom_call.1} parent=27 // pred_region
          %s412 = smul.u32 2, %s24
          %s414 = ssub.s32 1024, 1024
          %415 = vsyncadd %s405, %s414
          %s416 = smul.addr %s412, 4
          %s417 = smul.addr %s23, 8
          %s418 = sadd.s32 %s416, %s417
          %s419 = smul.addr %s418, 128
          %s420 = scalar_lea.hbm %s2, %s419
          %s421 = sshll.u32 %s408, 4
          %s422 = int_to_ptr.vmem [resolvable:$true] %s421
          %427 = dma.vmem_to_hbm [thread:$0]  %s422, 1024, %s420, %s405, 512, 512, 32
        $region36: #{tpu_custom_call.1} parent=27 // pred_fallthru
          _
      $region28: #{tpu_custom_call.1} parent=5 // pred_fallthru
        _
      %p428 = scmp.le.s32.totalorder 2, %s14
      // Predicated region
      $region37: #{tpu_custom_call.1} parent=5 // pred_check
        %p429 = pneg %p428
      $region38: #{tpu_custom_call.1} parent=5 // pred_check_branch
        %431 = sbr.rel (%p429) target = $region40
      $region39: #{tpu_custom_call.1} parent=5 // pred_region
        %s432 = ssub.s32 %s14, 2
        // Predicated region
        $region41: #{tpu_custom_call.1} parent=39 // pred_check
          %p433 = pneg %p106
        $region42: #{tpu_custom_call.1} parent=39 // pred_check_branch
          %435 = sbr.rel (%p433) target = $region44
        $region43: #{tpu_custom_call.1} parent=39 // pred_region
          %s436 = sand.u32 %s91, 1
          %s437 = scalar_lea.sflag [#allocation4], %s436
          %s438 = sand.u32 %s91, 1
          %s439 = smul.addr %s438, 64
          %s440 = scalar_lea.vmem [#allocation5], %s439
          %441 = dma.done %s437, 1024
        $region44: #{tpu_custom_call.1} parent=39 // pred_fallthru
          _
      $region40: #{tpu_custom_call.1} parent=5 // pred_fallthru
        _
    $region6: #{tpu_custom_call.1} parent=1 // loop_footer
      %s18 = sadd.s32 1, %s14
    $region7: #{tpu_custom_call.1} parent=1 // loop_footer_branch
      %13 = sbr.rel target = $region3
    $region8: #{tpu_custom_call.1} parent=1 // loop_exit
      _
    %442 = vsyncpa [#allocation3], 1
    %s443 = scalar_lea.sflag [#allocation3], 1
    %444 = vsyncpa %s443, 1
    %445 = vsyncpa [#allocation4], 1
    %s446 = scalar_lea.sflag [#allocation4], 1
    %447 = vsyncpa %s446, 1

</llo_original>
